<compile_context>
chip_gen: v7x
topology: tpu7x:2x2x1
jax: 0.10.0
libtpu: 0.0.40
codegen_flags: <defaults>
</compile_context>

<pallas_src>
import functools

import jax
import jax.numpy as jnp
from jax.experimental import pallas as pl
from jax.experimental.pallas import tpu as pltpu


def _round_up(x, m):
    return -(-x // m) * m


def critic_kernel(obs_ref, w1_ref, b1_ref, w2_ref, b2_ref, wvp_ref, bv_ref,
                  out_ref, *, act_dtype):
    """One batch tile: lane-packed MLP (block-diagonal MXU matmuls + tanh)
    and an NT head matmul that yields a lane-dense (P, TB/P) value block."""
    x = obs_ref[...]                                           # (TB/P, 128)

    # Layer 1: block-diagonal Linear (f32 accumulate) + Tanh.
    a1 = jnp.dot(x, w1_ref[...], preferred_element_type=jnp.float32)
    h1 = jnp.tanh((a1 + b1_ref[...]).astype(act_dtype))        # full-lane vregs

    # Layer 2: block-diagonal Linear + Tanh.
    a2 = jnp.dot(h1.astype(w2_ref.dtype), w2_ref[...],
                 preferred_element_type=jnp.float32)
    h2 = jnp.tanh((a2 + b2_ref[...]).astype(act_dtype))

    # Value head: contract the packed-hidden (last) dim of both operands
    # (NT matmul, q.k^T style) so the result is already lane-dense (P, TB/P).
    vals = jax.lax.dot_general(
        wvp_ref[...], h2.astype(wvp_ref.dtype),
        dimension_numbers=(((1,), (1,)), ((), ())),
        preferred_element_type=jnp.float32)
    out_ref[...] = vals + bv_ref[0]                            # scalar bias


def critic_forward(observations, params, states=None, dones=None,
                   *, block_b=4096, use_bf16=True):
    """Wrapper mirroring Critic.forward. rnn=None so states pass through."""
    w1, b1, w2, b2, wv, bv = params
    B, D = observations.shape
    H1 = w1.shape[1]
    H2 = w2.shape[1]
    assert 128 % D == 0, "lane packing assumes obs_dim divides 128"
    P = 128 // D                              # batch rows packed per lane group

    # --- tile sizing -------------------------------------------------------
    # TB multiple of P*128 keeps the packed-obs sublane dim %8 and the output
    # lane dim %128 (unmasked full-lane stores).  Large batches are split into
    # >=4 grid steps so v7x megacore can shard the parallel batch axis.
    unit = P * 128
    TB = min(_round_up(block_b, unit),
             max(unit, _round_up(pl.cdiv(B, 4), unit)))
    Bp = _round_up(B, TB)
    num_tiles = Bp // TB

    # --- dtypes ------------------------------------------------------------
    stream_dt = jnp.bfloat16 if use_bf16 else jnp.float32
    kind = jax.devices()[0].device_kind.lower()
    bf16_eup = use_bf16 and (("v6" in kind) or ("v7" in kind) or ("7x" in kind))
    act_dtype = jnp.bfloat16 if bf16_eup else jnp.float32   # v5e: f32 tanh

    # --- lane packing (wrapper-side, once) ---------------------------------
    obs = observations
    if Bp != B:
        obs = jnp.pad(obs, ((0, Bp - B), (0, 0)))
    obs_p = obs.reshape(Bp // P, P * D).astype(stream_dt)    # (Bp/P, 128)

    eye = jnp.eye(P, dtype=jnp.float32)
    w1_bd = jnp.kron(eye, w1.astype(jnp.float32)).astype(stream_dt)  # (128, P*H1)
    w2_bd = jnp.kron(eye, w2.astype(jnp.float32)).astype(stream_dt)  # (P*H1, P*H2)
    b1_bd = jnp.tile(b1.astype(jnp.float32).reshape(1, H1), (1, P))  # (1, P*H1)
    b2_bd = jnp.tile(b2.astype(jnp.float32).reshape(1, H2), (1, P))  # (1, P*H2)
    wvp = jnp.kron(eye, wv.astype(jnp.float32).T).astype(stream_dt)  # (P, P*H2)
    bv_s = bv.astype(jnp.float32).reshape((1,))                      # SMEM scalar

    # --- advisory cost model -------------------------------------------------
    itemsize = jnp.dtype(stream_dt).itemsize
    weight_bytes = (w1_bd.size + w2_bd.size + wvp.size) * itemsize + \
                   (b1_bd.size + b2_bd.size + 1) * 4
    cost = pl.CostEstimate(
        flops=2 * (Bp // P) * ((P * D) * (P * H1) + (P * H1) * (P * H2)
                               + (P * H2) * P),
        transcendentals=Bp * (H1 + H2),
        bytes_accessed=Bp * D * itemsize + Bp * 4 + weight_bytes,
    )

    const2d = lambda a: pl.BlockSpec(a.shape, lambda i: (0, 0))  # VMEM-resident

    out = pl.pallas_call(
        functools.partial(critic_kernel, act_dtype=act_dtype),
        out_shape=jax.ShapeDtypeStruct((num_tiles * P, TB // P), jnp.float32),
        grid=(num_tiles,),
        in_specs=[
            pl.BlockSpec((TB // P, P * D), lambda i: (i, 0)),  # streamed per tile
            const2d(w1_bd),
            const2d(b1_bd),
            const2d(w2_bd),
            const2d(b2_bd),
            const2d(wvp),
            pl.BlockSpec(memory_space=pltpu.MemorySpace.SMEM),  # bv scalar
        ],
        out_specs=pl.BlockSpec((P, TB // P), lambda i: (i, 0)),
        compiler_params=pltpu.CompilerParams(
            dimension_semantics=("parallel",),   # megacore split on v7x
        ),
        cost_estimate=cost,
    )(obs_p, w1_bd, b1_bd, w2_bd, b2_bd, wvp, bv_s)

    # Unpermute the packed (tile, p, r) layout back to batch order:
    # out[t, p, r] holds the value of batch row t*TB + r*P + p.
    vals = out.reshape(num_tiles, P, TB // P).transpose(0, 2, 1).reshape(Bp)
    values = vals[:B]                           # strip padding + .squeeze(-1)
    return values, states
    # TODO(synk): Rnn branch (self.f2) not implemented since rnn=None here.


def init_params(key, obs_dim, hidden_sizes):
    """Deterministic init mimicking init_weights (orthogonal, gain sqrt(2)/1.0)."""
    h1, h2 = hidden_sizes
    k1, k2, k3 = jax.random.split(key, 3)
    ortho = jax.nn.initializers.orthogonal
    w1 = ortho(scale=jnp.sqrt(2.0))(k1, (obs_dim, h1), jnp.float32)
    b1 = jnp.zeros((1, h1), jnp.float32)
    w2 = ortho(scale=jnp.sqrt(2.0))(k2, (h1, h2), jnp.float32)
    b2 = jnp.zeros((1, h2), jnp.float32)
    wv = ortho(scale=1.0)(k3, (h2, 1), jnp.float32)
    bv = jnp.zeros((1, 1), jnp.float32)
    return (w1, b1, w2, b2, wv, bv)


def critic_reference(observations, params):
    """Pure-JAX reference for correctness check."""
    w1, b1, w2, b2, wv, bv = params
    h = jnp.tanh(observations @ w1 + b1)
    h = jnp.tanh(h @ w2 + b2)
    v = h @ wv + bv
    return v[:, 0]


if __name__ == "__main__":
    key = jax.random.PRNGKey(0)
    k_obs, k_par = jax.random.split(key)

    OBS_DIM = 16
    HIDDEN = [32, 32]
    params = init_params(k_par, OBS_DIM, HIDDEN)

    # Case 1: multi-tile grid (B not a multiple of the tile), f32 path for a
    # tight numerical check of the lane packing / batch unpermute logic.
    B1 = 2500
    obs1 = jax.random.normal(k_obs, (B1, OBS_DIM), dtype=jnp.float32)
    fwd_f32 = jax.jit(functools.partial(critic_forward, block_b=1024,
                                        use_bf16=False))
    v1, s1 = fwd_f32(obs1, params)
    v1 = jax.block_until_ready(v1)
    ref1 = critic_reference(obs1, params)
    assert v1.shape == (B1,)
    assert s1 is None
    assert jnp.allclose(v1, ref1, atol=1e-4, rtol=1e-4)

    # Case 2: tiny batch (single padded tile), default bf16 streaming path.
    B2 = 8
    obs2 = jax.random.normal(jax.random.PRNGKey(1), (B2, OBS_DIM),
                             dtype=jnp.float32)
    v2, _ = critic_forward(obs2, params)
    v2 = jax.block_until_ready(v2)
    ref2 = critic_reference(obs2, params)
    assert v2.shape == (B2,)
    assert jnp.allclose(v2, ref2, atol=5e-2, rtol=5e-2)

    # Case 3: default (bf16) path on the larger batch, multi-tile.
    fwd_bf16 = jax.jit(critic_forward)
    v3, _ = fwd_bf16(obs1, params)
    v3 = jax.block_until_ready(v3)
    assert v3.shape == (B1,)
    assert jnp.allclose(v3, ref1, atol=5e-2, rtol=5e-2)

    print("KERNEL_OK")
</pallas_src>

<mosaic_0001>
module attributes {stable_mosaic.version = 11 : i64} {
  func.func @critic_kernel(%arg0: i32, %arg1: memref<128x128xf32, #tpu.memory_space<vmem>>, %arg2: memref<128x256xf32, #tpu.memory_space<vmem>>, %arg3: memref<1x256xf32, #tpu.memory_space<vmem>>, %arg4: memref<256x256xf32, #tpu.memory_space<vmem>>, %arg5: memref<1x256xf32, #tpu.memory_space<vmem>>, %arg6: memref<8x256xf32, #tpu.memory_space<vmem>>, %arg7: memref<1xf32, #tpu.memory_space<smem>>, %arg8: memref<8x128xf32, #tpu.memory_space<vmem>>) attributes {dimension_semantics = [#tpu.dimension_semantics<parallel>], iteration_bounds = array<i64: 3>, scalar_prefetch = 0 : i64, scratch_operands = 0 : i64, tpu.core_type = #tpu.core_type<tc>, window_params = [{transform_indices = @transform_0, window_bounds = array<i64: 128, 128>}, {pipeline_mode = #tpu.pipeline_mode<synchronous>, transform_indices = @transform_1, window_bounds = array<i64: 128, 256>}, {pipeline_mode = #tpu.pipeline_mode<synchronous>, transform_indices = @transform_2, window_bounds = array<i64: 1, 256>}, {pipeline_mode = #tpu.pipeline_mode<synchronous>, transform_indices = @transform_3, window_bounds = array<i64: 256, 256>}, {pipeline_mode = #tpu.pipeline_mode<synchronous>, transform_indices = @transform_4, window_bounds = array<i64: 1, 256>}, {pipeline_mode = #tpu.pipeline_mode<synchronous>, transform_indices = @transform_5, window_bounds = array<i64: 8, 256>}, {transform_indices = @transform_6, window_bounds = array<i64: 1>}, {transform_indices = @transform_7, window_bounds = array<i64: 8, 128>}]} {
    %c0 = arith.constant 0 : index
    %c0_0 = arith.constant 0 : index
    %0 = vector.load %arg1[%c0, %c0_0] : memref<128x128xf32, #tpu.memory_space<vmem>>, vector<128x128xf32>
    %c0_1 = arith.constant 0 : index
    %c0_2 = arith.constant 0 : index
    %1 = vector.load %arg2[%c0_1, %c0_2] : memref<128x256xf32, #tpu.memory_space<vmem>>, vector<128x256xf32>
    %cst = arith.constant dense<0.000000e+00> : vector<128x256xf32>
    %2 = tpu.matmul %0, %1, %cst {dimension_numbers = #tpu.dot_dimension_numbers<[1], [0], [0], [1], [0, 0, 1, 1], [], []>} : vector<128x128xf32>, vector<128x256xf32>, vector<128x256xf32> -> vector<128x256xf32>
    %c0_3 = arith.constant 0 : index
    %c0_4 = arith.constant 0 : index
    %3 = vector.load %arg3[%c0_3, %c0_4] : memref<1x256xf32, #tpu.memory_space<vmem>>, vector<1x256xf32>
    %4 = vector.broadcast %3 : vector<1x256xf32> to vector<128x256xf32>
    %5 = arith.addf %2, %4 : vector<128x256xf32>
    %6 = math.tanh %5 : vector<128x256xf32>
    %c0_5 = arith.constant 0 : index
    %c0_6 = arith.constant 0 : index
    %7 = vector.load %arg4[%c0_5, %c0_6] : memref<256x256xf32, #tpu.memory_space<vmem>>, vector<256x256xf32>
    %cst_7 = arith.constant dense<0.000000e+00> : vector<128x256xf32>
    %8 = tpu.matmul %6, %7, %cst_7 {dimension_numbers = #tpu.dot_dimension_numbers<[1], [0], [0], [1], [0, 0, 1, 1], [], []>} : vector<128x256xf32>, vector<256x256xf32>, vector<128x256xf32> -> vector<128x256xf32>
    %c0_8 = arith.constant 0 : index
    %c0_9 = arith.constant 0 : index
    %9 = vector.load %arg5[%c0_8, %c0_9] : memref<1x256xf32, #tpu.memory_space<vmem>>, vector<1x256xf32>
    %10 = vector.broadcast %9 : vector<1x256xf32> to vector<128x256xf32>
    %11 = arith.addf %8, %10 : vector<128x256xf32>
    %12 = math.tanh %11 : vector<128x256xf32>
    %c0_10 = arith.constant 0 : index
    %c0_11 = arith.constant 0 : index
    %13 = vector.load %arg6[%c0_10, %c0_11] : memref<8x256xf32, #tpu.memory_space<vmem>>, vector<8x256xf32>
    %cst_12 = arith.constant dense<0.000000e+00> : vector<8x128xf32>
    %14 = tpu.matmul %13, %12, %cst_12 {dimension_numbers = #tpu.dot_dimension_numbers<[1], [1], [0], [0], [0, 0, 1, 0], [], []>} : vector<8x256xf32>, vector<128x256xf32>, vector<8x128xf32> -> vector<8x128xf32>
    %c0_13 = arith.constant 0 : index
    %15 = memref.load %arg7[%c0_13] : memref<1xf32, #tpu.memory_space<smem>>
    %16 = vector.broadcast %15 : f32 to vector<8x128xf32>
    %17 = arith.addf %14, %16 : vector<8x128xf32>
    %c0_14 = arith.constant 0 : index
    %c0_15 = arith.constant 0 : index
    %18 = vector.load %arg8[%c0_14, %c0_15] : memref<8x128xf32, #tpu.memory_space<vmem>>, vector<8x128xf32>
    tpu.vector_store %arg8[%c0_14, %c0_15], %17 {strides = array<i32>} : memref<8x128xf32, #tpu.memory_space<vmem>>, vector<8x128xf32>,
    return
  }
  func.func @transform_0(%arg0: i32) -> (i32, i32) {
    %c0_i32 = arith.constant 0 : i32
    %c0_i32_0 = arith.constant 0 : i32
    return %arg0, %c0_i32 : i32, i32
  }
  func.func @transform_1(%arg0: i32) -> (i32, i32) {
    %c0_i32 = arith.constant 0 : i32
    %c0_i32_0 = arith.constant 0 : i32
    %c0_i32_1 = arith.constant 0 : i32
    return %c0_i32, %c0_i32_0 : i32, i32
  }
  func.func @transform_2(%arg0: i32) -> (i32, i32) {
    %c0_i32 = arith.constant 0 : i32
    %c0_i32_0 = arith.constant 0 : i32
    %c0_i32_1 = arith.constant 0 : i32
    return %c0_i32, %c0_i32_0 : i32, i32
  }
  func.func @transform_3(%arg0: i32) -> (i32, i32) {
    %c0_i32 = arith.constant 0 : i32
    %c0_i32_0 = arith.constant 0 : i32
    %c0_i32_1 = arith.constant 0 : i32
    return %c0_i32, %c0_i32_0 : i32, i32
  }
  func.func @transform_4(%arg0: i32) -> (i32, i32) {
    %c0_i32 = arith.constant 0 : i32
    %c0_i32_0 = arith.constant 0 : i32
    %c0_i32_1 = arith.constant 0 : i32
    return %c0_i32, %c0_i32_0 : i32, i32
  }
  func.func @transform_5(%arg0: i32) -> (i32, i32) {
    %c0_i32 = arith.constant 0 : i32
    %c0_i32_0 = arith.constant 0 : i32
    %c0_i32_1 = arith.constant 0 : i32
    return %c0_i32, %c0_i32_0 : i32, i32
  }
  func.func @transform_6(%arg0: i32) -> i32 {
    %c0_i32 = arith.constant 0 : i32
    %c0_i32_0 = arith.constant 0 : i32
    return %c0_i32 : i32
  }
  func.func @transform_7(%arg0: i32) -> (i32, i32) {
    %c0_i32 = arith.constant 0 : i32
    %c0_i32_0 = arith.constant 0 : i32
    return %arg0, %c0_i32 : i32, i32
  }
}

</mosaic_0001>

<llo_original>
// kernel: critic_forward.1
$region0: #{critic_forward.1}
  #allocation0 [shape = 'u32[]', space=smem, size = 0x4, offset = 0x4, fixed_abs, tag = 'smem constant byte address 0x4 - core index']
  #allocation1 [shape = 'u32[144,128]{1,0:T(1,128)}', space=vmem, size = 0x12000, scoped, tag = 'internal scratch']
  #allocation2 [shape = 'f32[1]{0:T(128)S(6)}', space=smem, size = 0x200, scoped, tag = 'scoped memory for critic_forward.1']
  %s0 = inlined_call_operand.vmem [shape: f32[384,128], index: 0, kind: input, shape index: {}]
  %s1 = inlined_call_operand.vmem [shape: f32[128,256], index: 1, kind: input, shape index: {}]
  %s2 = inlined_call_operand.vmem [shape: f32[1,256], index: 2, kind: input, shape index: {}]
  %s3 = inlined_call_operand.vmem [shape: f32[256,256], index: 3, kind: input, shape index: {}]
  %s4 = inlined_call_operand.vmem [shape: f32[1,256], index: 4, kind: input, shape index: {}]
  %s5 = inlined_call_operand.vmem [shape: f32[8,256], index: 5, kind: input, shape index: {}]
  %s6 = inlined_call_operand.<no memory space> [shape: f32[1], index: 6, kind: input, shape index: {}]
  %s7 = inlined_call_operand.vmem [shape: f32[24,128], index: 7, kind: output, shape index: {}]
  %s8 = sld [smem:[#allocation0]]
  $region61: #{critic_forward.1} parent=0
    _
  %s10 = ssub.s32 1, %s8
  %s11 = scalar_select 0, %s10, %s8
  %12 = sst [smem:[#allocation2]] %s6
  loop: start=0, step=1, limit=5
  $region2: #{critic_forward.1} parent=0 // loop_pre_header
    _
  $region3: #{critic_forward.1} parent=0 // loop_header
    %s14 = sphi 0, %s18
    %p15 = scmp.ge.s32.totalorder %s14, 5
    %s24 = sphi 0, %s26
    %s27 = sphi 0, %s24
    %s28 = sphi 0, %s27
    %s44 = sphi 0, %s28
    %s48 = sphi 0, %s48
    %s50 = sphi 0, %s48
    %s51 = sphi 0, %s50
    %s65 = sphi 0, %s51
    %s69 = sphi 0, %s69
    %s71 = sphi 0, %s69
    %s72 = sphi 0, %s71
    %s86 = sphi 0, %s72
    %s90 = sphi 0, %s90
    %s92 = sphi 0, %s90
    %s93 = sphi 0, %s92
    %s107 = sphi 0, %s93
    %s111 = sphi 0, %s111
    %s113 = sphi 0, %s111
    %s114 = sphi 0, %s113
    %s128 = sphi 0, %s114
    %s132 = sphi 0, %s132
    %s134 = sphi 0, %s132
    %s135 = sphi 0, %s134
    %s149 = sphi 0, %s135
    %s153 = sphi 0, %s153
    %s155 = sphi 0, %s153
    %s156 = sphi 0, %s155
    %s170 = sphi 0, %s156
    %s176 = sphi 0, %s178
    %s179 = sphi 0, %s176
    %s180 = sphi 0, %s179
    %s196 = sphi 0, %s180
  $region4: #{critic_forward.1} parent=0 // loop_header_branch
    %17 = sbr.rel (%p15) target = $region8
  $region5: #{critic_forward.1} parent=0 // loop_body
    %s19 = ssub.s32 %s14, 1
    %s20 = ssub.s32 %s14, 2
    %s21 = sadd.s32 %s14, 1
    %s22 = ssub.s32 %s14, %s21
    %p23 = scmp.eq.s32.totalorder %s22, 0
    %s25 = sadd.s32 %s24, 1
    %s26 = scalar_select %p23, %s24, %s25
    %p29 = pneg %p23
    %p30 = scmp.eq.s32.totalorder %s14, 2
    %p31 = por %p29, %p30
    %p32 = scmp.ne.s32.totalorder %s24, %s27
    %p33 = scmp.eq.s32.totalorder %s14, 0
    %p34 = por %p32, %p33
    %p35 = scmp.ne.s32.totalorder %s24, %s27
    %p36 = scmp.eq.s32.totalorder %s19, 2
    %p37 = por %p35, %p36
    %p38 = scmp.ne.s32.totalorder %s27, %s28
    %p39 = scmp.eq.s32.totalorder %s19, 0
    %p40 = por %p38, %p39
    %p41 = scmp.ne.s32.totalorder %s27, %s28
    %p42 = scmp.eq.s32.totalorder %s20, 2
    %p43 = por %p41, %p42
    %p45 = scmp.ne.s32.totalorder %s28, %s44
    %p46 = scmp.eq.s32.totalorder %s20, 0
    %p47 = por %p45, %p46
    %s49 = sadd.s32 %s48, 1
    %p52 = scmp.eq.s32.totalorder %s14, 2
    %p53 = scmp.ne.s32.totalorder %s48, %s50
    %p54 = scmp.eq.s32.totalorder %s14, 0
    %p55 = por %p53, %p54
    %p56 = scmp.ne.s32.totalorder %s48, %s50
    %p57 = scmp.eq.s32.totalorder %s19, 2
    %p58 = por %p56, %p57
    %p59 = scmp.ne.s32.totalorder %s50, %s51
    %p60 = scmp.eq.s32.totalorder %s19, 0
    %p61 = por %p59, %p60
    %p62 = scmp.ne.s32.totalorder %s50, %s51
    %p63 = scmp.eq.s32.totalorder %s20, 2
    %p64 = por %p62, %p63
    %p66 = scmp.ne.s32.totalorder %s51, %s65
    %p67 = scmp.eq.s32.totalorder %s20, 0
    %p68 = por %p66, %p67
    %s70 = sadd.s32 %s69, 1
    %p73 = scmp.eq.s32.totalorder %s14, 2
    %p74 = scmp.ne.s32.totalorder %s69, %s71
    %p75 = scmp.eq.s32.totalorder %s14, 0
    %p76 = por %p74, %p75
    %p77 = scmp.ne.s32.totalorder %s69, %s71
    %p78 = scmp.eq.s32.totalorder %s19, 2
    %p79 = por %p77, %p78
    %p80 = scmp.ne.s32.totalorder %s71, %s72
    %p81 = scmp.eq.s32.totalorder %s19, 0
    %p82 = por %p80, %p81
    %p83 = scmp.ne.s32.totalorder %s71, %s72
    %p84 = scmp.eq.s32.totalorder %s20, 2
    %p85 = por %p83, %p84
    %p87 = scmp.ne.s32.totalorder %s72, %s86
    %p88 = scmp.eq.s32.totalorder %s20, 0
    %p89 = por %p87, %p88
    %s91 = sadd.s32 %s90, 1
    %p94 = scmp.eq.s32.totalorder %s14, 2
    %p95 = scmp.ne.s32.totalorder %s90, %s92
    %p96 = scmp.eq.s32.totalorder %s14, 0
    %p97 = por %p95, %p96
    %p98 = scmp.ne.s32.totalorder %s90, %s92
    %p99 = scmp.eq.s32.totalorder %s19, 2
    %p100 = por %p98, %p99
    %p101 = scmp.ne.s32.totalorder %s92, %s93
    %p102 = scmp.eq.s32.totalorder %s19, 0
    %p103 = por %p101, %p102
    %p104 = scmp.ne.s32.totalorder %s92, %s93
    %p105 = scmp.eq.s32.totalorder %s20, 2
    %p106 = por %p104, %p105
    %p108 = scmp.ne.s32.totalorder %s93, %s107
    %p109 = scmp.eq.s32.totalorder %s20, 0
    %p110 = por %p108, %p109
    %s112 = sadd.s32 %s111, 1
    %p115 = scmp.eq.s32.totalorder %s14, 2
    %p116 = scmp.ne.s32.totalorder %s111, %s113
    %p117 = scmp.eq.s32.totalorder %s14, 0
    %p118 = por %p116, %p117
    %p119 = scmp.ne.s32.totalorder %s111, %s113
    %p120 = scmp.eq.s32.totalorder %s19, 2
    %p121 = por %p119, %p120
    %p122 = scmp.ne.s32.totalorder %s113, %s114
    %p123 = scmp.eq.s32.totalorder %s19, 0
    %p124 = por %p122, %p123
    %p125 = scmp.ne.s32.totalorder %s113, %s114
    %p126 = scmp.eq.s32.totalorder %s20, 2
    %p127 = por %p125, %p126
    %p129 = scmp.ne.s32.totalorder %s114, %s128
    %p130 = scmp.eq.s32.totalorder %s20, 0
    %p131 = por %p129, %p130
    %s133 = sadd.s32 %s132, 1
    %p136 = scmp.eq.s32.totalorder %s14, 2
    %p137 = scmp.ne.s32.totalorder %s132, %s134
    %p138 = scmp.eq.s32.totalorder %s14, 0
    %p139 = por %p137, %p138
    %p140 = scmp.ne.s32.totalorder %s132, %s134
    %p141 = scmp.eq.s32.totalorder %s19, 2
    %p142 = por %p140, %p141
    %p143 = scmp.ne.s32.totalorder %s134, %s135
    %p144 = scmp.eq.s32.totalorder %s19, 0
    %p145 = por %p143, %p144
    %p146 = scmp.ne.s32.totalorder %s134, %s135
    %p147 = scmp.eq.s32.totalorder %s20, 2
    %p148 = por %p146, %p147
    %p150 = scmp.ne.s32.totalorder %s135, %s149
    %p151 = scmp.eq.s32.totalorder %s20, 0
    %p152 = por %p150, %p151
    %s154 = sadd.s32 %s153, 1
    %p157 = scmp.eq.s32.totalorder %s14, 2
    %p158 = scmp.ne.s32.totalorder %s153, %s155
    %p159 = scmp.eq.s32.totalorder %s14, 0
    %p160 = por %p158, %p159
    %p161 = scmp.ne.s32.totalorder %s153, %s155
    %p162 = scmp.eq.s32.totalorder %s19, 2
    %p163 = por %p161, %p162
    %p164 = scmp.ne.s32.totalorder %s155, %s156
    %p165 = scmp.eq.s32.totalorder %s19, 0
    %p166 = por %p164, %p165
    %p167 = scmp.ne.s32.totalorder %s155, %s156
    %p168 = scmp.eq.s32.totalorder %s20, 2
    %p169 = por %p167, %p168
    %p171 = scmp.ne.s32.totalorder %s156, %s170
    %p172 = scmp.eq.s32.totalorder %s20, 0
    %p173 = por %p171, %p172
    %s174 = ssub.s32 %s14, %s21
    %p175 = scmp.eq.s32.totalorder %s174, 0
    %s177 = sadd.s32 %s176, 1
    %s178 = scalar_select %p175, %s176, %s177
    %p181 = pneg %p175
    %p182 = scmp.eq.s32.totalorder %s14, 2
    %p183 = por %p181, %p182
    %p184 = scmp.ne.s32.totalorder %s176, %s179
    %p185 = scmp.eq.s32.totalorder %s14, 0
    %p186 = por %p184, %p185
    %p187 = scmp.ne.s32.totalorder %s176, %s179
    %p188 = scmp.eq.s32.totalorder %s19, 2
    %p189 = por %p187, %p188
    %p190 = scmp.ne.s32.totalorder %s179, %s180
    %p191 = scmp.eq.s32.totalorder %s19, 0
    %p192 = por %p190, %p191
    %p193 = scmp.ne.s32.totalorder %s179, %s180
    %p194 = scmp.eq.s32.totalorder %s20, 2
    %p195 = por %p193, %p194
    %p197 = scmp.ne.s32.totalorder %s180, %s196
    %p198 = scmp.eq.s32.totalorder %s20, 0
    %p199 = por %p197, %p198
    %p200 = scmp.le.s32.totalorder 1, %s14
    %p201 = scmp.lt.s32.totalorder %s14, 4
    %p202 = pnand %p200, %p201
    %p203 = pneg %p202
    // Predicated region
    $region9: #{critic_forward.1} parent=5 // pred_check
      _
    $region10: #{critic_forward.1} parent=5 // pred_check_branch
      %205 = sbr.rel (%p202) target = $region12
    $region11: #{critic_forward.1} parent=5 // pred_region
      %s206 = ssub.s32 %s14, 1
      // Predicated region
      $region13: #{critic_forward.1} parent=11 // pred_check
        %p207 = pneg %p61
      $region14: #{critic_forward.1} parent=11 // pred_check_branch
        %209 = sbr.rel (%p207) target = $region16
      $region15: #{critic_forward.1} parent=11 // pred_region
        _
      $region16: #{critic_forward.1} parent=11 // pred_fallthru
        _
      // Predicated region
      $region17: #{critic_forward.1} parent=11 // pred_check
        %p210 = pneg %p82
      $region18: #{critic_forward.1} parent=11 // pred_check_branch
        %212 = sbr.rel (%p210) target = $region20
      $region19: #{critic_forward.1} parent=11 // pred_region
        _
      $region20: #{critic_forward.1} parent=11 // pred_fallthru
        _
      // Predicated region
      $region21: #{critic_forward.1} parent=11 // pred_check
        %p213 = pneg %p103
      $region22: #{critic_forward.1} parent=11 // pred_check_branch
        %215 = sbr.rel (%p213) target = $region24
      $region23: #{critic_forward.1} parent=11 // pred_region
        _
      $region24: #{critic_forward.1} parent=11 // pred_fallthru
        _
      // Predicated region
      $region25: #{critic_forward.1} parent=11 // pred_check
        %p216 = pneg %p124
      $region26: #{critic_forward.1} parent=11 // pred_check_branch
        %218 = sbr.rel (%p216) target = $region28
      $region27: #{critic_forward.1} parent=11 // pred_region
        _
      $region28: #{critic_forward.1} parent=11 // pred_fallthru
        _
      // Predicated region
      $region29: #{critic_forward.1} parent=11 // pred_check
        %p219 = pneg %p145
      $region30: #{critic_forward.1} parent=11 // pred_check_branch
        %221 = sbr.rel (%p219) target = $region32
      $region31: #{critic_forward.1} parent=11 // pred_region
        _
      $region32: #{critic_forward.1} parent=11 // pred_fallthru
        _
      // Predicated region
      $region33: #{critic_forward.1} parent=11 // pred_check
        %p222 = pneg %p166
      $region34: #{critic_forward.1} parent=11 // pred_check_branch
        %224 = sbr.rel (%p222) target = $region36
      $region35: #{critic_forward.1} parent=11 // pred_region
        _
      $region36: #{critic_forward.1} parent=11 // pred_fallthru
        _
    $region12: #{critic_forward.1} parent=5 // pred_fallthru
      _
    %p225 = scmp.lt.s32.totalorder %s14, 3
    // Predicated region
    $region37: #{critic_forward.1} parent=5 // pred_check
      %p226 = pneg %p225
    $region38: #{critic_forward.1} parent=5 // pred_check_branch
      %228 = sbr.rel (%p226) target = $region40
    $region39: #{critic_forward.1} parent=5 // pred_region
      // Predicated region
      $region41: #{critic_forward.1} parent=39 // pred_check
        %p229 = pneg %p34
      $region42: #{critic_forward.1} parent=39 // pred_check_branch
        %231 = sbr.rel (%p229) target = $region44
      $region43: #{critic_forward.1} parent=39 // pred_region
        %s232 = smul.u32 16, %s14
        %p233 = scmp.lt.s32.totalorder %s232, 47
        %s234 = scalar_select %p233, %s232, 47
        %s235 = smul.addr %s234, 8
        %s236 = scalar_lea.vmem %s0, %s235
        %s237 = smul.u32 16, %s14
      $region44: #{critic_forward.1} parent=39 // pred_fallthru
        _
    $region40: #{critic_forward.1} parent=5 // pred_fallthru
      _
    %p238 = scmp.le.s32.totalorder 1, %s14
    %p239 = scmp.lt.s32.totalorder %s14, 4
    %p240 = pnand %p238, %p239
    %p241 = pneg %p240
    // Predicated region
    $region45: #{critic_forward.1} parent=5 // pred_check
      _
    $region46: #{critic_forward.1} parent=5 // pred_check_branch
      %243 = sbr.rel (%p240) target = $region48
    $region47: #{critic_forward.1} parent=5 // pred_region
      %s244 = ssub.s32 %s14, 1
      %s245 = smul.u32 16, %s19
      %p246 = scmp.lt.s32.totalorder %s245, 47
      %s247 = scalar_select %p246, %s245, 47
      %s248 = smul.addr %s247, 8
      %s249 = scalar_lea.vmem %s0, %s248
      %p250 = pneg %p40
      %p251 = pneg %p37
      %p252 = pneg %p61
      %p253 = pneg %p58
      %p254 = pneg %p82
      %p255 = pneg %p79
      %p256 = pneg %p103
      %p257 = pneg %p100
      %p258 = pneg %p124
      %p259 = pneg %p121
      %p260 = pneg %p145
      %p261 = pneg %p142
      %p262 = pneg %p166
      %p263 = pneg %p163
      %p264 = pneg %p192
      %p265 = pneg %p189
      %p266 = scmp.lt.s32.totalorder %s19, 2
      %s267 = scalar_select %p266, %s19, 2
      %s268 = smul.addr %s267, 8
      %s269 = scalar_lea.vmem %s7, %s268
      %s270 = smul.u32 16, %s19
      %p271 = scmp.lt.s32.totalorder %s270, 47
      %s272 = scalar_select %p271, %s270, 47
      %s273 = smul.addr %s272, 8
      %s274 = scalar_lea.vmem %s0, %s273
      %s275 = smul.u32 16, %s19
      %p276 = scmp.lt.s32.totalorder %s19, 2
      %s277 = scalar_select %p276, %s19, 2
      %s278 = smul.addr %s277, 8
      %s279 = scalar_lea.vmem %s7, %s278
      %v280 = vld [vmem:[%s274] sm:$0xff]
      %v281 = vld [vmem:[%s274 + $0x8] sm:$0xff]
      %v282 = vld [vmem:[%s274 + $0x10] sm:$0xff]
      %v283 = vld [vmem:[%s274 + $0x18] sm:$0xff]
      %v284 = vld [vmem:[%s274 + $0x20] sm:$0xff]
      %v285 = vld [vmem:[%s274 + $0x28] sm:$0xff]
      %v286 = vld [vmem:[%s274 + $0x30] sm:$0xff]
      %v287 = vld [vmem:[%s274 + $0x38] sm:$0xff]
      %v288 = vld [vmem:[%s274 + $0x40] sm:$0xff]
      %v289 = vld [vmem:[%s274 + $0x48] sm:$0xff]
      %v290 = vld [vmem:[%s274 + $0x50] sm:$0xff]
      %v291 = vld [vmem:[%s274 + $0x58] sm:$0xff]
      %v292 = vld [vmem:[%s274 + $0x60] sm:$0xff]
      %v293 = vld [vmem:[%s274 + $0x68] sm:$0xff]
      %v294 = vld [vmem:[%s274 + $0x70] sm:$0xff]
      %v295 = vld [vmem:[%s274 + $0x78] sm:$0xff]
      %v296 = vld [vmem:[%s1] sm:$0xff]
      %v297 = vld [vmem:[%s1 + $0x8] sm:$0xff]
      %v298 = vld [vmem:[%s1 + $0x10] sm:$0xff]
      %v299 = vld [vmem:[%s1 + $0x18] sm:$0xff]
      %v300 = vld [vmem:[%s1 + $0x20] sm:$0xff]
      %v301 = vld [vmem:[%s1 + $0x28] sm:$0xff]
      %v302 = vld [vmem:[%s1 + $0x30] sm:$0xff]
      %v303 = vld [vmem:[%s1 + $0x38] sm:$0xff]
      %v304 = vld [vmem:[%s1 + $0x40] sm:$0xff]
      %v305 = vld [vmem:[%s1 + $0x48] sm:$0xff]
      %v306 = vld [vmem:[%s1 + $0x50] sm:$0xff]
      %v307 = vld [vmem:[%s1 + $0x58] sm:$0xff]
      %v308 = vld [vmem:[%s1 + $0x60] sm:$0xff]
      %v309 = vld [vmem:[%s1 + $0x68] sm:$0xff]
      %v310 = vld [vmem:[%s1 + $0x70] sm:$0xff]
      %v311 = vld [vmem:[%s1 + $0x78] sm:$0xff]
      %v312 = vld [vmem:[%s1 + $0x80] sm:$0xff]
      %v313 = vld [vmem:[%s1 + $0x88] sm:$0xff]
      %v314 = vld [vmem:[%s1 + $0x90] sm:$0xff]
      %v315 = vld [vmem:[%s1 + $0x98] sm:$0xff]
      %v316 = vld [vmem:[%s1 + $0xa0] sm:$0xff]
      %v317 = vld [vmem:[%s1 + $0xa8] sm:$0xff]
      %v318 = vld [vmem:[%s1 + $0xb0] sm:$0xff]
      %v319 = vld [vmem:[%s1 + $0xb8] sm:$0xff]
      %v320 = vld [vmem:[%s1 + $0xc0] sm:$0xff]
      %v321 = vld [vmem:[%s1 + $0xc8] sm:$0xff]
      %v322 = vld [vmem:[%s1 + $0xd0] sm:$0xff]
      %v323 = vld [vmem:[%s1 + $0xd8] sm:$0xff]
      %v324 = vld [vmem:[%s1 + $0xe0] sm:$0xff]
      %v325 = vld [vmem:[%s1 + $0xe8] sm:$0xff]
      %v326 = vld [vmem:[%s1 + $0xf0] sm:$0xff]
      %v327 = vld [vmem:[%s1 + $0xf8] sm:$0xff]
      %v328 = vld [vmem:[%s2] sm:$0x3]
      %v330 = vlaneseq
      %v331 = vshrl.u32 %v330, 7
      %v332 = vsub.s32 0, %v331
      %v333 = vrot.slane %v328, %v332
      %v334 = vlaneseq
      %v335 = vshrl.u32 %v334, 7
      %v336 = vsub.s32 1, %v335
      %v337 = vrot.slane %v328, %v336
      %340 = vmatprep.subr.mxu0 %v297
      %341 = vmatpush1.msra.mxu0 %v296
      %342 = vmatprep.subr.mxu0 %v299
      %343 = vmatpush1.msra.mxu0 %v298
      %344 = vmatprep.subr.mxu0 %v301
      %345 = vmatpush1.msra.mxu0 %v300
      %346 = vmatprep.subr.mxu0 %v303
      %347 = vmatpush1.msra.mxu0 %v302
      %348 = vmatprep.subr.mxu0 %v305
      %349 = vmatpush1.msra.mxu0 %v304
      %350 = vmatprep.subr.mxu0 %v307
      %351 = vmatpush1.msra.mxu0 %v306
      %352 = vmatprep.subr.mxu0 %v309
      %353 = vmatpush1.msra.mxu0 %v308
      %354 = vmatprep.subr.mxu0 %v311
      %355 = vmatpush1.msra.mxu0 %v310
      %356 = vmatprep.subr.mxu0 %v313
      %357 = vmatpush1.msra.mxu0 %v312
      %358 = vmatprep.subr.mxu0 %v315
      %359 = vmatpush1.msra.mxu0 %v314
      %360 = vmatprep.subr.mxu0 %v317
      %361 = vmatpush1.msra.mxu0 %v316
      %362 = vmatprep.subr.mxu0 %v319
      %363 = vmatpush1.msra.mxu0 %v318
      %364 = vmatprep.subr.mxu0 %v321
      %365 = vmatpush1.msra.mxu0 %v320
      %366 = vmatprep.subr.mxu0 %v323
      %367 = vmatpush1.msra.mxu0 %v322
      %368 = vmatprep.subr.mxu0 %v325
      %369 = vmatpush1.msra.mxu0 %v324
      %370 = vmatprep.subr.mxu0 %v327
      %371 = vmatpush1.msra.mxu0 %v326
      %372 = vmatprep.subr.mxu0 0.0
      %373 = vmatpush1.msra.mxu0 0.0
      %374 = vmatprep.subr.mxu0 0.0
      %375 = vmatpush1.msra.mxu0 0.0
      %376 = vmatprep.subr.mxu0 0.0
      %377 = vmatpush1.msra.mxu0 0.0
      %378 = vmatprep.subr.mxu0 0.0
      %379 = vmatpush1.msra.mxu0 0.0
      %380 = vmatprep.subr.mxu0 0.0
      %381 = vmatpush1.msra.mxu0 0.0
      %382 = vmatprep.subr.mxu0 0.0
      %383 = vmatpush1.msra.mxu0 0.0
      %384 = vmatprep.subr.mxu0 0.0
      %385 = vmatpush1.msra.mxu0 0.0
      %386 = vmatprep.subr.mxu0 0.0
      %387 = vmatpush1.msra.mxu0 0.0
      %388 = vmatprep.subr.mxu0 0.0
      %389 = vmatpush1.msra.mxu0 0.0
      %390 = vmatprep.subr.mxu0 0.0
      %391 = vmatpush1.msra.mxu0 0.0
      %392 = vmatprep.subr.mxu0 0.0
      %393 = vmatpush1.msra.mxu0 0.0
      %394 = vmatprep.subr.mxu0 0.0
      %395 = vmatpush1.msra.mxu0 0.0
      %396 = vmatprep.subr.mxu0 0.0
      %397 = vmatpush1.msra.mxu0 0.0
      %398 = vmatprep.subr.mxu0 0.0
      %399 = vmatpush1.msra.mxu0 0.0
      %400 = vmatprep.subr.mxu0 0.0
      %401 = vmatpush1.msra.mxu0 0.0
      %402 = vmatprep.subr.mxu0 0.0
      %403 = vmatpush1.msra.mxu0 0.0
      %404 = vmatprep.mubr.f32.mxu0 0.0
      %405 = vmatmul.mubr.f32.gmra.mrb[0].mxu0 %v280
      %v406 = vpop.f32.mrb[0].mxu0
      %v407 = vadd.f32 %v333, %v406
      %v408 = vpop.f32.mrb[0].mxu0
      %v409 = vadd.f32 %v337, %v408
      %410 = vmatprep.mubr.f32.mxu0 0.0
      %411 = vmatmul.mubr.f32.gmra.mrb[0].mxu0 %v281
      %v412 = vpop.f32.mrb[0].mxu0
      %v413 = vadd.f32 %v333, %v412
      %v414 = vpop.f32.mrb[0].mxu0
      %v415 = vadd.f32 %v337, %v414
      %416 = vmatprep.mubr.f32.mxu0 0.0
      %417 = vmatmul.mubr.f32.gmra.mrb[0].mxu0 %v282
      %v418 = vpop.f32.mrb[0].mxu0
      %v419 = vadd.f32 %v333, %v418
      %v420 = vpop.f32.mrb[0].mxu0
      %v421 = vadd.f32 %v337, %v420
      %422 = vmatprep.mubr.f32.mxu0 0.0
      %423 = vmatmul.mubr.f32.gmra.mrb[0].mxu0 %v283
      %v424 = vpop.f32.mrb[0].mxu0
      %v425 = vadd.f32 %v333, %v424
      %v426 = vpop.f32.mrb[0].mxu0
      %v427 = vadd.f32 %v337, %v426
      %428 = vmatprep.mubr.f32.mxu0 0.0
      %429 = vmatmul.mubr.f32.gmra.mrb[0].mxu0 %v284
      %v430 = vpop.f32.mrb[0].mxu0
      %v431 = vadd.f32 %v333, %v430
      %v432 = vpop.f32.mrb[0].mxu0
      %v433 = vadd.f32 %v337, %v432
      %434 = vmatprep.mubr.f32.mxu0 0.0
      %435 = vmatmul.mubr.f32.gmra.mrb[0].mxu0 %v285
      %v436 = vpop.f32.mrb[0].mxu0
      %v437 = vadd.f32 %v333, %v436
      %v438 = vpop.f32.mrb[0].mxu0
      %v439 = vadd.f32 %v337, %v438
      %440 = vmatprep.mubr.f32.mxu0 0.0
      %441 = vmatmul.mubr.f32.gmra.mrb[0].mxu0 %v286
      %v442 = vpop.f32.mrb[0].mxu0
      %v443 = vadd.f32 %v333, %v442
      %v444 = vpop.f32.mrb[0].mxu0
      %v445 = vadd.f32 %v337, %v444
      %446 = vmatprep.mubr.f32.mxu0 0.0
      %447 = vmatmul.mubr.f32.gmra.mrb[0].mxu0 %v287
      %v448 = vpop.f32.mrb[0].mxu0
      %v449 = vadd.f32 %v333, %v448
      %v450 = vpop.f32.mrb[0].mxu0
      %v451 = vadd.f32 %v337, %v450
      %452 = vmatprep.mubr.f32.mxu0 0.0
      %453 = vmatmul.mubr.f32.gmra.mrb[0].mxu0 %v288
      %v454 = vpop.f32.mrb[0].mxu0
      %v455 = vadd.f32 %v333, %v454
      %v456 = vpop.f32.mrb[0].mxu0
      %v457 = vadd.f32 %v337, %v456
      %458 = vmatprep.mubr.f32.mxu0 0.0
      %459 = vmatmul.mubr.f32.gmra.mrb[0].mxu0 %v289
      %v460 = vpop.f32.mrb[0].mxu0
      %v461 = vadd.f32 %v333, %v460
      %v462 = vpop.f32.mrb[0].mxu0
      %v463 = vadd.f32 %v337, %v462
      %464 = vmatprep.mubr.f32.mxu0 0.0
      %465 = vmatmul.mubr.f32.gmra.mrb[0].mxu0 %v290
      %v466 = vpop.f32.mrb[0].mxu0
      %v467 = vadd.f32 %v333, %v466
      %v468 = vpop.f32.mrb[0].mxu0
      %v469 = vadd.f32 %v337, %v468
      %470 = vmatprep.mubr.f32.mxu0 0.0
      %471 = vmatmul.mubr.f32.gmra.mrb[0].mxu0 %v291
      %v472 = vpop.f32.mrb[0].mxu0
      %v473 = vadd.f32 %v333, %v472
      %v474 = vpop.f32.mrb[0].mxu0
      %v475 = vadd.f32 %v337, %v474
      %476 = vmatprep.mubr.f32.mxu0 0.0
      %477 = vmatmul.mubr.f32.gmra.mrb[0].mxu0 %v292
      %v478 = vpop.f32.mrb[0].mxu0
      %v479 = vadd.f32 %v333, %v478
      %v480 = vpop.f32.mrb[0].mxu0
      %v481 = vadd.f32 %v337, %v480
      %482 = vmatprep.mubr.f32.mxu0 0.0
      %483 = vmatmul.mubr.f32.gmra.mrb[0].mxu0 %v293
      %v484 = vpop.f32.mrb[0].mxu0
      %v485 = vadd.f32 %v333, %v484
      %v486 = vpop.f32.mrb[0].mxu0
      %v487 = vadd.f32 %v337, %v486
      %488 = vmatprep.mubr.f32.mxu0 0.0
      %489 = vmatmul.mubr.f32.gmra.mrb[0].mxu0 %v294
      %v490 = vpop.f32.mrb[0].mxu0
      %v491 = vadd.f32 %v333, %v490
      %v492 = vpop.f32.mrb[0].mxu0
      %v493 = vadd.f32 %v337, %v492
      %494 = vmatprep.mubr.f32.mxu0 0.0
      %495 = vmatmul.mubr.f32.gmra.mrb[0].mxu0 %v295
      %v496 = vpop.f32.mrb[0].mxu0
      %v497 = vadd.f32 %v333, %v496
      %v498 = vpop.f32.mrb[0].mxu0
      %v499 = vadd.f32 %v337, %v498
      %500 = vdwg.mxu0
      %v501 = vtanh.pop %v407
      %v502 = vtanh.pop %v409
      %v503 = vtanh.pop %v413
      %v504 = vtanh.pop %v415
      %v505 = vtanh.pop %v419
      %v506 = vtanh.pop %v421
      %v507 = vtanh.pop %v425
      %v508 = vtanh.pop %v427
      %v509 = vtanh.pop %v431
      %v510 = vtanh.pop %v433
      %v511 = vtanh.pop %v437
      %v512 = vtanh.pop %v439
      %v513 = vtanh.pop %v443
      %v514 = vtanh.pop %v445
      %v515 = vtanh.pop %v449
      %v516 = vtanh.pop %v451
      %v517 = vtanh.pop %v455
      %v518 = vtanh.pop %v457
      %v519 = vtanh.pop %v461
      %v520 = vtanh.pop %v463
      %v521 = vtanh.pop %v467
      %v522 = vtanh.pop %v469
      %v523 = vtanh.pop %v473
      %v524 = vtanh.pop %v475
      %v525 = vtanh.pop %v479
      %v526 = vtanh.pop %v481
      %v527 = vtanh.pop %v485
      %v528 = vtanh.pop %v487
      %v529 = vtanh.pop %v491
      %v530 = vtanh.pop %v493
      %v531 = vtanh.pop %v497
      %v532 = vtanh.pop %v499
      %v533 = vld [vmem:[%s3] sm:$0xff]
      %v534 = vld [vmem:[%s3 + $0x8] sm:$0xff]
      %v535 = vld [vmem:[%s3 + $0x10] sm:$0xff]
      %v536 = vld [vmem:[%s3 + $0x18] sm:$0xff]
      %v537 = vld [vmem:[%s3 + $0x20] sm:$0xff]
      %v538 = vld [vmem:[%s3 + $0x28] sm:$0xff]
      %v539 = vld [vmem:[%s3 + $0x30] sm:$0xff]
      %v540 = vld [vmem:[%s3 + $0x38] sm:$0xff]
      %v541 = vld [vmem:[%s3 + $0x40] sm:$0xff]
      %v542 = vld [vmem:[%s3 + $0x48] sm:$0xff]
      %v543 = vld [vmem:[%s3 + $0x50] sm:$0xff]
      %v544 = vld [vmem:[%s3 + $0x58] sm:$0xff]
      %v545 = vld [vmem:[%s3 + $0x60] sm:$0xff]
      %v546 = vld [vmem:[%s3 + $0x68] sm:$0xff]
      %v547 = vld [vmem:[%s3 + $0x70] sm:$0xff]
      %v548 = vld [vmem:[%s3 + $0x78] sm:$0xff]
      %v549 = vld [vmem:[%s3 + $0x80] sm:$0xff]
      %v550 = vld [vmem:[%s3 + $0x88] sm:$0xff]
      %v551 = vld [vmem:[%s3 + $0x90] sm:$0xff]
      %v552 = vld [vmem:[%s3 + $0x98] sm:$0xff]
      %v553 = vld [vmem:[%s3 + $0xa0] sm:$0xff]
      %v554 = vld [vmem:[%s3 + $0xa8] sm:$0xff]
      %v555 = vld [vmem:[%s3 + $0xb0] sm:$0xff]
      %v556 = vld [vmem:[%s3 + $0xb8] sm:$0xff]
      %v557 = vld [vmem:[%s3 + $0xc0] sm:$0xff]
      %v558 = vld [vmem:[%s3 + $0xc8] sm:$0xff]
      %v559 = vld [vmem:[%s3 + $0xd0] sm:$0xff]
      %v560 = vld [vmem:[%s3 + $0xd8] sm:$0xff]
      %v561 = vld [vmem:[%s3 + $0xe0] sm:$0xff]
      %v562 = vld [vmem:[%s3 + $0xe8] sm:$0xff]
      %v563 = vld [vmem:[%s3 + $0xf0] sm:$0xff]
      %v564 = vld [vmem:[%s3 + $0xf8] sm:$0xff]
      %v565 = vld [vmem:[%s3 + $0x100] sm:$0xff]
      %v566 = vld [vmem:[%s3 + $0x108] sm:$0xff]
      %v567 = vld [vmem:[%s3 + $0x110] sm:$0xff]
      %v568 = vld [vmem:[%s3 + $0x118] sm:$0xff]
      %v569 = vld [vmem:[%s3 + $0x120] sm:$0xff]
      %v570 = vld [vmem:[%s3 + $0x128] sm:$0xff]
      %v571 = vld [vmem:[%s3 + $0x130] sm:$0xff]
      %v572 = vld [vmem:[%s3 + $0x138] sm:$0xff]
      %v573 = vld [vmem:[%s3 + $0x140] sm:$0xff]
      %v574 = vld [vmem:[%s3 + $0x148] sm:$0xff]
      %v575 = vld [vmem:[%s3 + $0x150] sm:$0xff]
      %v576 = vld [vmem:[%s3 + $0x158] sm:$0xff]
      %v577 = vld [vmem:[%s3 + $0x160] sm:$0xff]
      %v578 = vld [vmem:[%s3 + $0x168] sm:$0xff]
      %v579 = vld [vmem:[%s3 + $0x170] sm:$0xff]
      %v580 = vld [vmem:[%s3 + $0x178] sm:$0xff]
      %v581 = vld [vmem:[%s3 + $0x180] sm:$0xff]
      %v582 = vld [vmem:[%s3 + $0x188] sm:$0xff]
      %v583 = vld [vmem:[%s3 + $0x190] sm:$0xff]
      %v584 = vld [vmem:[%s3 + $0x198] sm:$0xff]
      %v585 = vld [vmem:[%s3 + $0x1a0] sm:$0xff]
      %v586 = vld [vmem:[%s3 + $0x1a8] sm:$0xff]
      %v587 = vld [vmem:[%s3 + $0x1b0] sm:$0xff]
      %v588 = vld [vmem:[%s3 + $0x1b8] sm:$0xff]
      %v589 = vld [vmem:[%s3 + $0x1c0] sm:$0xff]
      %v590 = vld [vmem:[%s3 + $0x1c8] sm:$0xff]
      %v591 = vld [vmem:[%s3 + $0x1d0] sm:$0xff]
      %v592 = vld [vmem:[%s3 + $0x1d8] sm:$0xff]
      %v593 = vld [vmem:[%s3 + $0x1e0] sm:$0xff]
      %v594 = vld [vmem:[%s3 + $0x1e8] sm:$0xff]
      %v595 = vld [vmem:[%s3 + $0x1f0] sm:$0xff]
      %v596 = vld [vmem:[%s3 + $0x1f8] sm:$0xff]
      %v597 = vld [vmem:[%s4] sm:$0x3]
      %v599 = vlaneseq
      %v600 = vshrl.u32 %v599, 7
      %v601 = vsub.s32 0, %v600
      %v602 = vrot.slane %v597, %v601
      %v603 = vlaneseq
      %v604 = vshrl.u32 %v603, 7
      %v605 = vsub.s32 1, %v604
      %v606 = vrot.slane %v597, %v605
      %609 = vmatprep.subr.mxu0 %v534
      %610 = vmatpush1.msra.mxu0 %v533
      %611 = vmatprep.subr.mxu0 %v536
      %612 = vmatpush1.msra.mxu0 %v535
      %613 = vmatprep.subr.mxu0 %v538
      %614 = vmatpush1.msra.mxu0 %v537
      %615 = vmatprep.subr.mxu0 %v540
      %616 = vmatpush1.msra.mxu0 %v539
      %617 = vmatprep.subr.mxu0 %v542
      %618 = vmatpush1.msra.mxu0 %v541
      %619 = vmatprep.subr.mxu0 %v544
      %620 = vmatpush1.msra.mxu0 %v543
      %621 = vmatprep.subr.mxu0 %v546
      %622 = vmatpush1.msra.mxu0 %v545
      %623 = vmatprep.subr.mxu0 %v548
      %624 = vmatpush1.msra.mxu0 %v547
      %625 = vmatprep.subr.mxu0 %v550
      %626 = vmatpush1.msra.mxu0 %v549
      %627 = vmatprep.subr.mxu0 %v552
      %628 = vmatpush1.msra.mxu0 %v551
      %629 = vmatprep.subr.mxu0 %v554
      %630 = vmatpush1.msra.mxu0 %v553
      %631 = vmatprep.subr.mxu0 %v556
      %632 = vmatpush1.msra.mxu0 %v555
      %633 = vmatprep.subr.mxu0 %v558
      %634 = vmatpush1.msra.mxu0 %v557
      %635 = vmatprep.subr.mxu0 %v560
      %636 = vmatpush1.msra.mxu0 %v559
      %637 = vmatprep.subr.mxu0 %v562
      %638 = vmatpush1.msra.mxu0 %v561
      %639 = vmatprep.subr.mxu0 %v564
      %640 = vmatpush1.msra.mxu0 %v563
      %641 = vmatprep.subr.mxu0 %v566
      %642 = vmatpush1.msra.mxu0 %v565
      %643 = vmatprep.subr.mxu0 %v568
      %644 = vmatpush1.msra.mxu0 %v567
      %645 = vmatprep.subr.mxu0 %v570
      %646 = vmatpush1.msra.mxu0 %v569
      %647 = vmatprep.subr.mxu0 %v572
      %648 = vmatpush1.msra.mxu0 %v571
      %649 = vmatprep.subr.mxu0 %v574
      %650 = vmatpush1.msra.mxu0 %v573
      %651 = vmatprep.subr.mxu0 %v576
      %652 = vmatpush1.msra.mxu0 %v575
      %653 = vmatprep.subr.mxu0 %v578
      %654 = vmatpush1.msra.mxu0 %v577
      %655 = vmatprep.subr.mxu0 %v580
      %656 = vmatpush1.msra.mxu0 %v579
      %657 = vmatprep.subr.mxu0 %v582
      %658 = vmatpush1.msra.mxu0 %v581
      %659 = vmatprep.subr.mxu0 %v584
      %660 = vmatpush1.msra.mxu0 %v583
      %661 = vmatprep.subr.mxu0 %v586
      %662 = vmatpush1.msra.mxu0 %v585
      %663 = vmatprep.subr.mxu0 %v588
      %664 = vmatpush1.msra.mxu0 %v587
      %665 = vmatprep.subr.mxu0 %v590
      %666 = vmatpush1.msra.mxu0 %v589
      %667 = vmatprep.subr.mxu0 %v592
      %668 = vmatpush1.msra.mxu0 %v591
      %669 = vmatprep.subr.mxu0 %v594
      %670 = vmatpush1.msra.mxu0 %v593
      %671 = vmatprep.subr.mxu0 %v596
      %672 = vmatpush1.msra.mxu0 %v595
      %673 = vmatprep.mubr.f32.mxu0 %v502
      %674 = vmatmul.mubr.f32.gmra.mrb[0].mxu0 %v501
      %v675 = vpop.f32.mrb[0].mxu0
      %v676 = vadd.f32 %v602, %v675
      %v677 = vpop.f32.mrb[0].mxu0
      %v678 = vadd.f32 %v606, %v677
      %679 = vmatprep.mubr.f32.mxu0 %v504
      %680 = vmatmul.mubr.f32.gmra.mrb[0].mxu0 %v503
      %v681 = vpop.f32.mrb[0].mxu0
      %v682 = vadd.f32 %v602, %v681
      %v683 = vpop.f32.mrb[0].mxu0
      %v684 = vadd.f32 %v606, %v683
      %685 = vmatprep.mubr.f32.mxu0 %v506
      %686 = vmatmul.mubr.f32.gmra.mrb[0].mxu0 %v505
      %v687 = vpop.f32.mrb[0].mxu0
      %v688 = vadd.f32 %v602, %v687
      %v689 = vpop.f32.mrb[0].mxu0
      %v690 = vadd.f32 %v606, %v689
      %691 = vmatprep.mubr.f32.mxu0 %v508
      %692 = vmatmul.mubr.f32.gmra.mrb[0].mxu0 %v507
      %v693 = vpop.f32.mrb[0].mxu0
      %v694 = vadd.f32 %v602, %v693
      %v695 = vpop.f32.mrb[0].mxu0
      %v696 = vadd.f32 %v606, %v695
      %697 = vmatprep.mubr.f32.mxu0 %v510
      %698 = vmatmul.mubr.f32.gmra.mrb[0].mxu0 %v509
      %v699 = vpop.f32.mrb[0].mxu0
      %v700 = vadd.f32 %v602, %v699
      %v701 = vpop.f32.mrb[0].mxu0
      %v702 = vadd.f32 %v606, %v701
      %703 = vmatprep.mubr.f32.mxu0 %v512
      %704 = vmatmul.mubr.f32.gmra.mrb[0].mxu0 %v511
      %v705 = vpop.f32.mrb[0].mxu0
      %v706 = vadd.f32 %v602, %v705
      %v707 = vpop.f32.mrb[0].mxu0
      %v708 = vadd.f32 %v606, %v707
      %709 = vmatprep.mubr.f32.mxu0 %v514
      %710 = vmatmul.mubr.f32.gmra.mrb[0].mxu0 %v513
      %v711 = vpop.f32.mrb[0].mxu0
      %v712 = vadd.f32 %v602, %v711
      %v713 = vpop.f32.mrb[0].mxu0
      %v714 = vadd.f32 %v606, %v713
      %715 = vmatprep.mubr.f32.mxu0 %v516
      %716 = vmatmul.mubr.f32.gmra.mrb[0].mxu0 %v515
      %v717 = vpop.f32.mrb[0].mxu0
      %v718 = vadd.f32 %v602, %v717
      %v719 = vpop.f32.mrb[0].mxu0
      %v720 = vadd.f32 %v606, %v719
      %721 = vmatprep.mubr.f32.mxu0 %v518
      %722 = vmatmul.mubr.f32.gmra.mrb[0].mxu0 %v517
      %v723 = vpop.f32.mrb[0].mxu0
      %v724 = vadd.f32 %v602, %v723
      %v725 = vpop.f32.mrb[0].mxu0
      %v726 = vadd.f32 %v606, %v725
      %727 = vmatprep.mubr.f32.mxu0 %v520
      %728 = vmatmul.mubr.f32.gmra.mrb[0].mxu0 %v519
      %v729 = vpop.f32.mrb[0].mxu0
      %v730 = vadd.f32 %v602, %v729
      %v731 = vpop.f32.mrb[0].mxu0
      %v732 = vadd.f32 %v606, %v731
      %733 = vmatprep.mubr.f32.mxu0 %v522
      %734 = vmatmul.mubr.f32.gmra.mrb[0].mxu0 %v521
      %v735 = vpop.f32.mrb[0].mxu0
      %v736 = vadd.f32 %v602, %v735
      %v737 = vpop.f32.mrb[0].mxu0
      %v738 = vadd.f32 %v606, %v737
      %739 = vmatprep.mubr.f32.mxu0 %v524
      %740 = vmatmul.mubr.f32.gmra.mrb[0].mxu0 %v523
      %v741 = vpop.f32.mrb[0].mxu0
      %v742 = vadd.f32 %v602, %v741
      %v743 = vpop.f32.mrb[0].mxu0
      %v744 = vadd.f32 %v606, %v743
      %745 = vmatprep.mubr.f32.mxu0 %v526
      %746 = vmatmul.mubr.f32.gmra.mrb[0].mxu0 %v525
      %v747 = vpop.f32.mrb[0].mxu0
      %v748 = vadd.f32 %v602, %v747
      %v749 = vpop.f32.mrb[0].mxu0
      %v750 = vadd.f32 %v606, %v749
      %751 = vmatprep.mubr.f32.mxu0 %v528
      %752 = vmatmul.mubr.f32.gmra.mrb[0].mxu0 %v527
      %v753 = vpop.f32.mrb[0].mxu0
      %v754 = vadd.f32 %v602, %v753
      %v755 = vpop.f32.mrb[0].mxu0
      %v756 = vadd.f32 %v606, %v755
      %757 = vmatprep.mubr.f32.mxu0 %v530
      %758 = vmatmul.mubr.f32.gmra.mrb[0].mxu0 %v529
      %v759 = vpop.f32.mrb[0].mxu0
      %v760 = vadd.f32 %v602, %v759
      %v761 = vpop.f32.mrb[0].mxu0
      %v762 = vadd.f32 %v606, %v761
      %763 = vmatprep.mubr.f32.mxu0 %v532
      %764 = vmatmul.mubr.f32.gmra.mrb[0].mxu0 %v531
      %v765 = vpop.f32.mrb[0].mxu0
      %v766 = vadd.f32 %v602, %v765
      %v767 = vpop.f32.mrb[0].mxu0
      %v768 = vadd.f32 %v606, %v767
      %769 = vdwg.mxu0
      %v770 = vtanh.pop %v676
      %v771 = vtanh.pop %v678
      %v772 = vtanh.pop %v682
      %v773 = vtanh.pop %v684
      %v774 = vtanh.pop %v688
      %v775 = vtanh.pop %v690
      %v776 = vtanh.pop %v694
      %v777 = vtanh.pop %v696
      %v778 = vtanh.pop %v700
      %v779 = vtanh.pop %v702
      %v780 = vtanh.pop %v706
      %v781 = vtanh.pop %v708
      %v782 = vtanh.pop %v712
      %v783 = vtanh.pop %v714
      %v784 = vtanh.pop %v718
      %v785 = vtanh.pop %v720
      %v786 = vtanh.pop %v724
      %v787 = vtanh.pop %v726
      %v788 = vtanh.pop %v730
      %v789 = vtanh.pop %v732
      %v790 = vtanh.pop %v736
      %v791 = vtanh.pop %v738
      %v792 = vtanh.pop %v742
      %v793 = vtanh.pop %v744
      %v794 = vtanh.pop %v748
      %v795 = vtanh.pop %v750
      %v796 = vtanh.pop %v754
      %v797 = vtanh.pop %v756
      %v798 = vtanh.pop %v760
      %v799 = vtanh.pop %v762
      %v800 = vtanh.pop %v766
      %v801 = vtanh.pop %v768
      %v802 = vld [vmem:[%s5] sm:$0xff]
      %v803 = vld [vmem:[%s5 + $0x8] sm:$0xff]
      %s804 = sld [smem:[#allocation2]]
      %v805 = vstv %s804
      %806 = vmatprep.subr.mxu0 %v771
      %807 = vmatpush1.xpose.msra.mxu0 %v770
      %808 = vmatprep.subr.mxu0 %v773
      %809 = vmatpush1.xpose.msra.mxu0 %v772
      %810 = vmatprep.subr.mxu0 %v775
      %811 = vmatpush1.xpose.msra.mxu0 %v774
      %812 = vmatprep.subr.mxu0 %v777
      %813 = vmatpush1.xpose.msra.mxu0 %v776
      %814 = vmatprep.subr.mxu0 %v779
      %815 = vmatpush1.xpose.msra.mxu0 %v778
      %816 = vmatprep.subr.mxu0 %v781
      %817 = vmatpush1.xpose.msra.mxu0 %v780
      %818 = vmatprep.subr.mxu0 %v783
      %819 = vmatpush1.xpose.msra.mxu0 %v782
      %820 = vmatprep.subr.mxu0 %v785
      %821 = vmatpush1.xpose.msra.mxu0 %v784
      %822 = vmatprep.subr.mxu0 %v787
      %823 = vmatpush1.xpose.msra.mxu0 %v786
      %824 = vmatprep.subr.mxu0 %v789
      %825 = vmatpush1.xpose.msra.mxu0 %v788
      %826 = vmatprep.subr.mxu0 %v791
      %827 = vmatpush1.xpose.msra.mxu0 %v790
      %828 = vmatprep.subr.mxu0 %v793
      %829 = vmatpush1.xpose.msra.mxu0 %v792
      %830 = vmatprep.subr.mxu0 %v795
      %831 = vmatpush1.xpose.msra.mxu0 %v794
      %832 = vmatprep.subr.mxu0 %v797
      %833 = vmatpush1.xpose.msra.mxu0 %v796
      %834 = vmatprep.subr.mxu0 %v799
      %835 = vmatpush1.xpose.msra.mxu0 %v798
      %836 = vmatprep.subr.mxu0 %v801
      %837 = vmatpush1.xpose.msra.mxu0 %v800
      %838 = vmatprep.subr.mxu0 0.0
      %839 = vmatpush1.xpose.msra.mxu0 0.0
      %840 = vmatprep.subr.mxu0 0.0
      %841 = vmatpush1.xpose.msra.mxu0 0.0
      %842 = vmatprep.subr.mxu0 0.0
      %843 = vmatpush1.xpose.msra.mxu0 0.0
      %844 = vmatprep.subr.mxu0 0.0
      %845 = vmatpush1.xpose.msra.mxu0 0.0
      %846 = vmatprep.subr.mxu0 0.0
      %847 = vmatpush1.xpose.msra.mxu0 0.0
      %848 = vmatprep.subr.mxu0 0.0
      %849 = vmatpush1.xpose.msra.mxu0 0.0
      %850 = vmatprep.subr.mxu0 0.0
      %851 = vmatpush1.xpose.msra.mxu0 0.0
      %852 = vmatprep.subr.mxu0 0.0
      %853 = vmatpush1.xpose.msra.mxu0 0.0
      %854 = vmatprep.subr.mxu0 0.0
      %855 = vmatpush1.xpose.msra.mxu0 0.0
      %856 = vmatprep.subr.mxu0 0.0
      %857 = vmatpush1.xpose.msra.mxu0 0.0
      %858 = vmatprep.subr.mxu0 0.0
      %859 = vmatpush1.xpose.msra.mxu0 0.0
      %860 = vmatprep.subr.mxu0 0.0
      %861 = vmatpush1.xpose.msra.mxu0 0.0
      %862 = vmatprep.subr.mxu0 0.0
      %863 = vmatpush1.xpose.msra.mxu0 0.0
      %864 = vmatprep.subr.mxu0 0.0
      %865 = vmatpush1.xpose.msra.mxu0 0.0
      %866 = vmatprep.subr.mxu0 0.0
      %867 = vmatpush1.xpose.msra.mxu0 0.0
      %868 = vmatprep.subr.mxu0 0.0
      %869 = vmatpush1.xpose.msra.mxu0 0.0
      %870 = vmatprep.mubr.f32.mxu0 %v803
      %871 = vmatmul.mubr.f32.gmra.mrb[0].mxu0 %v802
      %v872 = vpop.f32.mrb[0].mxu0
      %v873 = vadd.f32 %v805, %v872
      %v874 = vpop.f32.mrb[0].mxu0
      %875 = vdwg.mxu0
      %876 = vst [vmem:[%s279] sm:$0xff] %v873
      %p877 = scmp.lt.s32.totalorder %s19, 2
      %s878 = scalar_select %p877, %s19, 2
      %s879 = smul.addr %s878, 8
      %s880 = scalar_lea.vmem %s7, %s879
      // Predicated region
      $region49: #{critic_forward.1} parent=47 // pred_check
        %p881 = pneg %p189
      $region50: #{critic_forward.1} parent=47 // pred_check_branch
        %883 = sbr.rel (%p881) target = $region52
      $region51: #{critic_forward.1} parent=47 // pred_region
        _
      $region52: #{critic_forward.1} parent=47 // pred_fallthru
        _
    $region48: #{critic_forward.1} parent=5 // pred_fallthru
      _
    %p884 = scmp.le.s32.totalorder 2, %s14
    // Predicated region
    $region53: #{critic_forward.1} parent=5 // pred_check
      %p885 = pneg %p884
    $region54: #{critic_forward.1} parent=5 // pred_check_branch
      %887 = sbr.rel (%p885) target = $region56
    $region55: #{critic_forward.1} parent=5 // pred_region
      %s888 = ssub.s32 %s14, 2
      // Predicated region
      $region57: #{critic_forward.1} parent=55 // pred_check
        %p889 = pneg %p195
      $region58: #{critic_forward.1} parent=55 // pred_check_branch
        %891 = sbr.rel (%p889) target = $region60
      $region59: #{critic_forward.1} parent=55 // pred_region
        %p892 = scmp.lt.s32.totalorder %s20, 2
        %s893 = scalar_select %p892, %s20, 2
        %s894 = smul.addr %s893, 8
        %s895 = scalar_lea.vmem %s7, %s894
      $region60: #{critic_forward.1} parent=55 // pred_fallthru
        _
    $region56: #{critic_forward.1} parent=5 // pred_fallthru
      _
  $region6: #{critic_forward.1} parent=0 // loop_footer
    %s18 = sadd.s32 1, %s14
  $region7: #{critic_forward.1} parent=0 // loop_footer_branch
    %13 = sbr.rel target = $region3
  $region8: #{critic_forward.1} parent=0 // loop_exit
    _

</llo_original>
